<compile_context>
chip_gen: v7x
topology: tpu7x:2x2x1
jax: 0.10.0
libtpu: 0.0.40
codegen_flags: <defaults>
</compile_context>

<pallas_src>
import functools

import jax
import jax.numpy as jnp
from jax import lax
from jax.experimental import pallas as pl
from jax.experimental.pallas import tpu as pltpu


# --------------------------------------------------------------------------
# Hardware / tiling helpers.
# --------------------------------------------------------------------------
def _round_up(x, mult):
    return ((x + mult - 1) // mult) * mult


def _tpu_vmem_capacity_bytes():
    """Physical VMEM of the current chip; conservative fallback = 64 MiB (v7x)."""
    try:
        cap = int(pltpu.get_tpu_info().vmem_capacity_bytes)
        if cap > 0:
            return cap
    except Exception:
        pass
    return 64 << 20


def _vmem_limit_bytes():
    """Scoped VMEM limit requested from the compiler (v5e/v6e ~96 MiB, v7x 48 MiB)."""
    cap = _tpu_vmem_capacity_bytes()
    return min(int(cap * 0.75), 100 << 20)


def _num_tensorcores():
    """Best-effort TensorCore-per-chip count (v7x has 2); defaults to 1."""
    try:
        info = pltpu.get_tpu_info()
        for attr in ("num_tensorcores", "tensorcores_per_chip", "num_cores",
                     "cores_per_chip"):
            v = getattr(info, attr, None)
            if v:
                return int(v)
    except Exception:
        pass
    return 1


def _choose_k_tile(n, m, elem_bytes, resident_bytes):
    """Largest lane-aligned K tile whose double-buffered (n, tk) input block fits
    the scoped-VMEM budget next to the resident blocks.  Returns None if even a
    128-wide tile does not fit (caller falls back to N row blocking)."""
    m128 = _round_up(m, 128)
    budget = int(_vmem_limit_bytes() * 0.9) - resident_bytes   # small headroom
    bytes_per_col = 2 * n * elem_bytes                         # double-buffered
    if budget < bytes_per_col * 128:
        return None
    return min((budget // bytes_per_col) // 128 * 128, m128)


def _choose_row_blocked_tiling(n, m, elem_bytes, max_tn=None):
    """(tn, tk) for the N-row-blocked gram kernel (large-n / multi-TC path)."""
    m128 = _round_up(m, 128)
    limit = int(_vmem_limit_bytes() * 0.9)
    tn = _round_up(n, 8)
    if max_tn is not None:
        tn = min(tn, _round_up(max_tn, 8))
    while True:
        resident = 2 * tn * n * 4                       # f32 output row block
        per_col = 2 * (tn + n) * elem_bytes             # lhs + rhs K tiles
        budget = limit - resident
        if budget >= per_col * 128 or tn <= 8:
            break
        tn = max(8, _round_up(tn // 2, 8))
    tk = max(128, min((max(budget, 0) // per_col) // 128 * 128, m128))
    return tn, tk


def _prepare_features(x):
    """(a, b, c, d) -> (a*b, c*d) view in the activation's native dtype.

    No padding and no forced f32 upcast: bf16 activations go straight to the
    MXU (accumulation stays f32); only non-bf16/f32 dtypes are normalized."""
    a, b, c, d = x.shape
    feats = x.reshape(a * b, c * d)
    if feats.dtype != jnp.bfloat16 and feats.dtype != jnp.float32:
        feats = feats.astype(jnp.float32)
    return feats


def _mask_ragged_tail(block, k, m, tk):
    """Zero the columns of a (rows, tk) K tile that lie past the true K extent m.
    Only emitted when m % tk != 0; a cheap VPU select next to the MXU dot that
    replaces any host-side padded copy of the features."""
    valid = m - k * tk                                   # >= tk for non-last tiles
    col = lax.broadcasted_iota(jnp.int32, block.shape, dimension=1)
    return jnp.where(col < valid, block, jnp.zeros_like(block))


# --------------------------------------------------------------------------
# Gram-matrix kernels:  G = F @ F.T / divisor, accumulated over K tiles.
# Contraction is dot_general dim 1 with dim 1 (no explicit K-tile transpose);
# TODO(synk): verify on v5e that Mosaic lowers this NT form without a per-tile
# XLU transpose (bundle dump / vxpose) as the review requests.
# --------------------------------------------------------------------------
def _gram_kernel(x_ref, o_ref, *, inv_divisor, m, tk):
    """All N rows resident; accumulate directly into the VMEM output block."""
    k = pl.program_id(0)

    @pl.when(k == 0)
    def _():
        o_ref[...] = jnp.zeros_like(o_ref)

    xk = x_ref[...]                                      # (N, TK), native dtype
    if m % tk != 0:
        xk = _mask_ragged_tail(xk, k, m, tk)
    o_ref[...] += lax.dot_general(
        xk, xk,
        dimension_numbers=(((1,), (1,)), ((), ())),
        preferred_element_type=jnp.float32,
    )

    @pl.when(k == pl.num_programs(0) - 1)
    def _():
        o_ref[...] *= inv_divisor


def _gram_rows_kernel(lhs_ref, rhs_ref, o_ref, *, inv_divisor, m, tk):
    """N-row-blocked variant: grid (row_blocks, k_tiles); the row axis is
    independent ('parallel' -> megacore axis on multi-TensorCore chips)."""
    k = pl.program_id(1)

    @pl.when(k == 0)
    def _():
        o_ref[...] = jnp.zeros_like(o_ref)

    lhs = lhs_ref[...]                                   # (TN, TK)
    rhs = rhs_ref[...]                                   # (N,  TK)
    if m % tk != 0:
        lhs = _mask_ragged_tail(lhs, k, m, tk)
        rhs = _mask_ragged_tail(rhs, k, m, tk)
    o_ref[...] += lax.dot_general(
        lhs, rhs,
        dimension_numbers=(((1,), (1,)), ((), ())),
        preferred_element_type=jnp.float32,
    )

    @pl.when(k == pl.num_programs(1) - 1)
    def _():
        o_ref[...] *= inv_divisor


def _gram_full_rows(feats, n, m, inv_divisor, tk):
    kernel = functools.partial(_gram_kernel, inv_divisor=inv_divisor, m=m, tk=tk)
    return pl.pallas_call(
        kernel,
        out_shape=jax.ShapeDtypeStruct((n, n), jnp.float32),
        grid_spec=pltpu.PrefetchScalarGridSpec(
            num_scalar_prefetch=0,
            grid=(pl.cdiv(m, tk),),
            in_specs=[pl.BlockSpec((n, tk), lambda k: (0, k))],
            out_specs=pl.BlockSpec((n, n), lambda k: (0, 0)),
        ),
        compiler_params=pltpu.CompilerParams(
            dimension_semantics=("arbitrary",),
            vmem_limit_bytes=_vmem_limit_bytes(),
        ),
    )(feats)


def _gram_row_blocked(feats, n, m, inv_divisor, tn, tk):
    kernel = functools.partial(_gram_rows_kernel, inv_divisor=inv_divisor, m=m, tk=tk)
    return pl.pallas_call(
        kernel,
        out_shape=jax.ShapeDtypeStruct((n, n), jnp.float32),
        grid_spec=pltpu.PrefetchScalarGridSpec(
            num_scalar_prefetch=0,
            grid=(pl.cdiv(n, tn), pl.cdiv(m, tk)),
            in_specs=[pl.BlockSpec((tn, tk), lambda i, k: (i, k)),   # row block
                      pl.BlockSpec((n, tk), lambda i, k: (0, k))],   # all rows
            out_specs=pl.BlockSpec((tn, n), lambda i, k: (i, 0)),
        ),
        compiler_params=pltpu.CompilerParams(
            dimension_semantics=("parallel", "arbitrary"),
            vmem_limit_bytes=_vmem_limit_bytes(),
        ),
    )(feats, feats)


def gram_matrix(x, *, max_row_block=None):
    """x: (a, b, c, d) NCHW array -> (a*b, a*b) gram matrix / (a*b*c*d), f32."""
    a, b, c, d = x.shape
    n, m = a * b, c * d
    feats = _prepare_features(x)
    elem = feats.dtype.itemsize
    inv_div = 1.0 / float(a * b * c * d)

    if max_row_block is None:
        # Resident: (n, n) f32 output block (counted double-buffered).
        tk = _choose_k_tile(n, m, elem, resident_bytes=2 * n * n * 4)
        if tk is not None:
            return _gram_full_rows(feats, n, m, inv_div, tk)
    tn, tk = _choose_row_blocked_tiling(n, m, elem, max_tn=max_row_block)
    return _gram_row_blocked(feats, n, m, inv_div, tn, tk)


# --------------------------------------------------------------------------
# Fused style-loss kernel: accumulate G over K tiles into a VMEM-resident
# scratch, then on the last grid step compute mean((G/divisor - target)^2)
# into a (1, 1) output.  No HBM write of G, no second kernel launch.
# --------------------------------------------------------------------------
def _style_loss_kernel(x_ref, t_ref, o_ref, acc_ref, *,
                       inv_divisor, inv_count, m, tk):
    k = pl.program_id(0)

    @pl.when(k == 0)
    def _():
        acc_ref[...] = jnp.zeros_like(acc_ref)

    xk = x_ref[...]                                      # (N, TK), native dtype
    if m % tk != 0:
        xk = _mask_ragged_tail(xk, k, m, tk)
    acc_ref[...] += lax.dot_general(
        xk, xk,
        dimension_numbers=(((1,), (1,)), ((), ())),
        preferred_element_type=jnp.float32,
    )

    @pl.when(k == pl.num_programs(0) - 1)
    def _():
        diff = acc_ref[...] * inv_divisor - t_ref[...]
        o_ref[...] = jnp.sum(diff * diff, axis=(0, 1), keepdims=True) * inv_count


def style_loss(x, target_gram):
    """Scalar mean((gram(x) - target_gram)^2)."""
    a, b, c, d = x.shape
    n, m = a * b, c * d
    feats = _prepare_features(x)
    elem = feats.dtype.itemsize
    target_gram = target_gram.astype(jnp.float32)

    # Residents: f32 accumulator (n, n) + target gram (n, n); the target has a
    # constant index_map but is budgeted as double-buffered (pipeline_mode =
    # pl.Buffered(1) would halve that; left out to keep lowering conservative).
    tk = _choose_k_tile(n, m, elem, resident_bytes=3 * n * n * 4)

    ncores = _num_tensorcores()
    if tk is None or (ncores > 1 and n >= 1024):
        # Large-n path: the (n, n) residents don't fit next to useful K tiles,
        # or we want the row-parallel megacore axis on multi-TC chips (v7x).
        # N-row-blocked gram kernel + tiny (n, n) MSE combine in XLA.
        max_tn = None if ncores <= 1 else -(-n // ncores)
        gram = gram_matrix(x, max_row_block=max_tn)
        return jnp.mean((gram - target_gram) ** 2)

    kernel = functools.partial(
        _style_loss_kernel,
        inv_divisor=1.0 / float(a * b * c * d),
        inv_count=1.0 / float(n * n),
        m=m, tk=tk,
    )
    out = pl.pallas_call(
        kernel,
        out_shape=jax.ShapeDtypeStruct((1, 1), jnp.float32),
        grid_spec=pltpu.PrefetchScalarGridSpec(
            num_scalar_prefetch=0,
            grid=(pl.cdiv(m, tk),),
            in_specs=[
                pl.BlockSpec((n, tk), lambda k: (0, k)),   # feature K tiles
                pl.BlockSpec((n, n), lambda k: (0, 0)),    # target gram, resident
            ],
            out_specs=pl.BlockSpec((1, 1), lambda k: (0, 0)),
            scratch_shapes=[pltpu.VMEM((n, n), jnp.float32)],
        ),
        compiler_params=pltpu.CompilerParams(
            dimension_semantics=("arbitrary",),
            vmem_limit_bytes=_vmem_limit_bytes(),
        ),
    )(feats, target_gram)
    return out[0, 0]


# --------------------------------------------------------------------------
# StyleLoss module equivalent (forward-pass semantics of the nn.Module).
# --------------------------------------------------------------------------
class StyleLoss:
    def __init__(self, target_feature):
        # Target gram is fixed ("detached") at construction.
        self.target = jax.lax.stop_gradient(gram_matrix(target_feature))
        self.loss = None

    def __call__(self, _input):
        # TODO(synk): no custom_vjp is defined; like the reference this module
        # is forward-only here (gradients through the Pallas kernels omitted).
        self.loss = style_loss(_input, self.target)
        return _input


if __name__ == "__main__":
    key = jax.random.PRNGKey(0)
    k1, k2, k3, k4 = jax.random.split(key, 4)

    def ref_gram(v):
        aa, bb, cc, dd = v.shape
        f = v.reshape(aa * bb, cc * dd).astype(jnp.float32)
        g = jnp.dot(f, f.T, precision=jax.lax.Precision.HIGHEST)
        return g / (aa * bb * cc * dd)

    # --- Config 1: canonical small NCHW shape, lane-aligned K (fused path). ---
    a, b, c, d = 2, 4, 16, 16
    target_feature = jax.random.normal(k1, (a, b, c, d), dtype=jnp.float32)
    x = jax.random.normal(k2, (a, b, c, d), dtype=jnp.float32)

    style = StyleLoss(target_feature)
    out = style(x)
    loss = jax.block_until_ready(style.loss)
    out = jax.block_until_ready(out)

    ref_loss = jnp.mean((ref_gram(x) - ref_gram(target_feature)) ** 2)
    assert jnp.allclose(loss, ref_loss, rtol=1e-4, atol=1e-6), (loss, ref_loss)
    assert jnp.array_equal(out, x)                       # forward returns its input

    # --- Config 2: ragged K (m = 100, not lane aligned) exercising the
    #     in-kernel tail mask, plus the row-blocked gram fallback kernel. ---
    a2, b2, c2, d2 = 2, 8, 10, 10                        # n = 16, m = 100
    tf2 = jax.random.normal(k3, (a2, b2, c2, d2), dtype=jnp.float32)
    x2 = jax.random.normal(k4, (a2, b2, c2, d2), dtype=jnp.float32)

    style2 = StyleLoss(tf2)
    style2(x2)
    loss2 = jax.block_until_ready(style2.loss)
    ref_loss2 = jnp.mean((ref_gram(x2) - ref_gram(tf2)) ** 2)
    assert jnp.allclose(loss2, ref_loss2, rtol=1e-4, atol=1e-6), (loss2, ref_loss2)

    feats2 = _prepare_features(x2)
    g_rb = jax.block_until_ready(
        _gram_row_blocked(feats2, 16, 100, 1.0 / (a2 * b2 * c2 * d2), tn=8, tk=128))
    assert jnp.allclose(g_rb, ref_gram(x2), rtol=1e-4, atol=1e-6)

    # --- Config 3: native bf16 activations straight into the MXU. ---
    x_bf = x.astype(jnp.bfloat16)
    tf_bf = target_feature.astype(jnp.bfloat16)
    style_bf = StyleLoss(tf_bf)
    style_bf(x_bf)
    loss_bf = jax.block_until_ready(style_bf.loss)
    ref_loss_bf = jnp.mean((ref_gram(x_bf) - ref_gram(tf_bf)) ** 2)
    assert jnp.allclose(loss_bf, ref_loss_bf, rtol=2e-2, atol=1e-6), (loss_bf, ref_loss_bf)

    print("KERNEL_OK")
</pallas_src>

<mosaic_0001>
module attributes {stable_mosaic.version = 11 : i64} {
  func.func @_gram_kernel(%arg0: i32, %arg1: memref<8x256xf32, #tpu.memory_space<vmem>>, %arg2: memref<8x8xf32, #tpu.memory_space<vmem>>) attributes {dimension_semantics = [#tpu.dimension_semantics<arbitrary>], iteration_bounds = array<i64: 1>, scalar_prefetch = 0 : i64, scratch_operands = 0 : i64, tpu.core_type = #tpu.core_type<tc>, window_params = [{transform_indices = @transform_0, window_bounds = array<i64: 8, 256>}, {pipeline_mode = #tpu.pipeline_mode<synchronous>, transform_indices = @transform_1, window_bounds = array<i64: 8, 8>}]} {
    %c0_i32 = arith.constant 0 : i32
    %0 = arith.cmpi eq, %arg0, %c0_i32 : i32
    %1 = arith.extui %0 : i1 to i32
    %c0_i32_0 = arith.constant 0 : i32
    %2 = arith.cmpi ne, %1, %c0_i32_0 : i32
    scf.if %2 {
      %cst_8 = arith.constant 0.000000e+00 : f32
      %11 = vector.broadcast %cst_8 : f32 to vector<8x8xf32>
      %c0_9 = arith.constant 0 : index
      %c0_10 = arith.constant 0 : index
      %12 = vector.load %arg2[%c0_9, %c0_10] : memref<8x8xf32, #tpu.memory_space<vmem>>, vector<8x8xf32>
      tpu.vector_store %arg2[%c0_9, %c0_10], %11 {strides = array<i32>} : memref<8x8xf32, #tpu.memory_space<vmem>>, vector<8x8xf32>,
    } else {
    }
    %c0 = arith.constant 0 : index
    %c0_1 = arith.constant 0 : index
    %3 = vector.load %arg1[%c0, %c0_1] : memref<8x256xf32, #tpu.memory_space<vmem>>, vector<8x256xf32>
    %c0_2 = arith.constant 0 : index
    %c0_3 = arith.constant 0 : index
    %4 = vector.load %arg2[%c0_2, %c0_3] : memref<8x8xf32, #tpu.memory_space<vmem>>, vector<8x8xf32>
    %cst = arith.constant dense<0.000000e+00> : vector<8x8xf32>
    %5 = tpu.matmul %3, %3, %cst {dimension_numbers = #tpu.dot_dimension_numbers<[1], [1], [0], [0], [0, 0, 1, 0], [], []>} : vector<8x256xf32>, vector<8x256xf32>, vector<8x8xf32> -> vector<8x8xf32>
    %6 = arith.addf %4, %5 : vector<8x8xf32>
    %c0_4 = arith.constant 0 : index
    %c0_5 = arith.constant 0 : index
    %7 = vector.load %arg2[%c0_4, %c0_5] : memref<8x8xf32, #tpu.memory_space<vmem>>, vector<8x8xf32>
    tpu.vector_store %arg2[%c0_4, %c0_5], %6 {strides = array<i32>} : memref<8x8xf32, #tpu.memory_space<vmem>>, vector<8x8xf32>,
    %c0_i32_6 = arith.constant 0 : i32
    %8 = arith.cmpi eq, %arg0, %c0_i32_6 : i32
    %9 = arith.extui %8 : i1 to i32
    %c0_i32_7 = arith.constant 0 : i32
    %10 = arith.cmpi ne, %9, %c0_i32_7 : i32
    scf.if %10 {
      %c0_8 = arith.constant 0 : index
      %c0_9 = arith.constant 0 : index
      %11 = vector.load %arg2[%c0_8, %c0_9] : memref<8x8xf32, #tpu.memory_space<vmem>>, vector<8x8xf32>
      %cst_10 = arith.constant 4.8828125E-4 : f32
      %12 = vector.broadcast %cst_10 : f32 to vector<8x8xf32>
      %13 = arith.mulf %11, %12 : vector<8x8xf32>
      %c0_11 = arith.constant 0 : index
      %c0_12 = arith.constant 0 : index
      %14 = vector.load %arg2[%c0_11, %c0_12] : memref<8x8xf32, #tpu.memory_space<vmem>>, vector<8x8xf32>
      tpu.vector_store %arg2[%c0_11, %c0_12], %13 {strides = array<i32>} : memref<8x8xf32, #tpu.memory_space<vmem>>, vector<8x8xf32>,
    } else {
    }
    return
  }
  func.func @transform_0(%arg0: i32) -> (i32, i32) {
    %c0_i32 = arith.constant 0 : i32
    %c0_i32_0 = arith.constant 0 : i32
    return %c0_i32, %arg0 : i32, i32
  }
  func.func @transform_1(%arg0: i32) -> (i32, i32) {
    %c0_i32 = arith.constant 0 : i32
    %c0_i32_0 = arith.constant 0 : i32
    %c0_i32_1 = arith.constant 0 : i32
    return %c0_i32, %c0_i32_0 : i32, i32
  }
}

</mosaic_0001>

<llo_original>
// kernel: tpu_custom_call.1
$region0: #{tpu_custom_call.1}
  #allocation0 [shape = 'u32[]', space=smem, size = 0x4, offset = 0x4, fixed_abs, tag = 'smem constant byte address 0x4 - core index']
  #allocation1 [shape = 'u32[144,128]{1,0:T(1,128)}', space=vmem, size = 0x12000, scoped, tag = 'internal scratch']
  %s0 = inlined_call_operand.hbm [shape: f32[8,256], index: 0, kind: input, shape index: {}]
  %s1 = inlined_call_operand.hbm [shape: f32[8,8], index: 1, kind: output, shape index: {}]
  %s2 = sld [smem:[#allocation0]]
  $region26: #{tpu_custom_call.1} parent=0
    _
  %s4 = ssub.s32 1, %s2
  %s5 = scalar_select 0, %s4, %s2
  $region1: #{tpu_custom_call.1} parent=0
    #allocation2 [shape = 'u8[8192]{0}', space=vmem, size = 0x2000, scoped, tag = 'input window, operand 0, single buffered']
    #allocation3 [shape = 's32[1]{0}', space=sflag, size = 0x4, scoped, tag = 'scoped memory for tpu_custom_call.1']
    #allocation4 [shape = 's32[1]{0}', space=sflag, size = 0x4, scoped, tag = 'scoped memory for tpu_custom_call.1']
    #allocation5 [shape = 'u8[4096]{0}', space=vmem, size = 0x1000, scoped, tag = 'output window, operand 0, single buffered']
    %6 = vsyncpa [#allocation3], 0
    %7 = vsyncpa [#allocation4], 0
    // Predicated region
    $region2: #{tpu_custom_call.1} parent=1 // pred_check
      _
    $region3: #{tpu_custom_call.1} parent=1 // pred_check_branch
      %9 = sbr.rel (0) target = $region5
    $region4: #{tpu_custom_call.1} parent=1 // pred_region
      %s11 = ssub.s32 256, 256
      %12 = vsyncadd [#allocation3], %s11
      %s14 = sshll.u32 [#allocation2], 4
      %s15 = int_to_ptr.vmem [resolvable:$true] %s14
      %17 = dma.hbm_to_vmem [thread:$0]  %s0, 256, %s15, [#allocation3]
    $region5: #{tpu_custom_call.1} parent=1 // pred_fallthru
      _
    // Predicated region
    $region6: #{tpu_custom_call.1} parent=1 // pred_check
      _
    $region7: #{tpu_custom_call.1} parent=1 // pred_check_branch
      %19 = sbr.rel (0) target = $region9
    $region8: #{tpu_custom_call.1} parent=1 // pred_region
      %20 = dma.done [#allocation3], 256
    $region9: #{tpu_custom_call.1} parent=1 // pred_fallthru
      _
    %p21 = scmp.eq.s32.totalorder 0, 0
    // Predicated region
    $region10: #{tpu_custom_call.1} parent=1 // pred_check
      %p22 = pneg %p21
    $region11: #{tpu_custom_call.1} parent=1 // pred_check_branch
      %24 = sbr.rel (%p22) target = $region13
    $region12: #{tpu_custom_call.1} parent=1 // pred_region
      %vm25 = vcmask 64512
      %26 = vst.msk [vmem:[#allocation5] sm:$0xff] %vm25, 0.0
    $region13: #{tpu_custom_call.1} parent=1 // pred_fallthru
      _
    %v27 = vld [vmem:[#allocation2] sm:$0xff]
    %v28 = vld [vmem:[#allocation2 + $0x8] sm:$0xff]
    %v29 = vld [vmem:[#allocation5] sm:$0xff]
    %30 = vmatprep.subr.mxu0 %v28
    %31 = vmatpush1.xpose.msra.mxu0 %v27
    %32 = vmatprep.subr.mxu0 0.0
    %33 = vmatpush1.xpose.msra.mxu0 0.0
    %34 = vmatprep.subr.mxu0 0.0
    %35 = vmatpush1.xpose.msra.mxu0 0.0
    %36 = vmatprep.subr.mxu0 0.0
    %37 = vmatpush1.xpose.msra.mxu0 0.0
    %38 = vmatprep.subr.mxu0 0.0
    %39 = vmatpush1.xpose.msra.mxu0 0.0
    %40 = vmatprep.subr.mxu0 0.0
    %41 = vmatpush1.xpose.msra.mxu0 0.0
    %42 = vmatprep.subr.mxu0 0.0
    %43 = vmatpush1.xpose.msra.mxu0 0.0
    %44 = vmatprep.subr.mxu0 0.0
    %45 = vmatpush1.xpose.msra.mxu0 0.0
    %46 = vmatprep.subr.mxu0 0.0
    %47 = vmatpush1.xpose.msra.mxu0 0.0
    %48 = vmatprep.subr.mxu0 0.0
    %49 = vmatpush1.xpose.msra.mxu0 0.0
    %50 = vmatprep.subr.mxu0 0.0
    %51 = vmatpush1.xpose.msra.mxu0 0.0
    %52 = vmatprep.subr.mxu0 0.0
    %53 = vmatpush1.xpose.msra.mxu0 0.0
    %54 = vmatprep.subr.mxu0 0.0
    %55 = vmatpush1.xpose.msra.mxu0 0.0
    %56 = vmatprep.subr.mxu0 0.0
    %57 = vmatpush1.xpose.msra.mxu0 0.0
    %58 = vmatprep.subr.mxu0 0.0
    %59 = vmatpush1.xpose.msra.mxu0 0.0
    %60 = vmatprep.subr.mxu0 0.0
    %61 = vmatpush1.xpose.msra.mxu0 0.0
    %62 = vmatprep.subr.mxu0 0.0
    %63 = vmatpush1.xpose.msra.mxu0 0.0
    %64 = vmatprep.subr.mxu0 0.0
    %65 = vmatpush1.xpose.msra.mxu0 0.0
    %66 = vmatprep.subr.mxu0 0.0
    %67 = vmatpush1.xpose.msra.mxu0 0.0
    %68 = vmatprep.subr.mxu0 0.0
    %69 = vmatpush1.xpose.msra.mxu0 0.0
    %70 = vmatprep.subr.mxu0 0.0
    %71 = vmatpush1.xpose.msra.mxu0 0.0
    %72 = vmatprep.subr.mxu0 0.0
    %73 = vmatpush1.xpose.msra.mxu0 0.0
    %74 = vmatprep.subr.mxu0 0.0
    %75 = vmatpush1.xpose.msra.mxu0 0.0
    %76 = vmatprep.subr.mxu0 0.0
    %77 = vmatpush1.xpose.msra.mxu0 0.0
    %78 = vmatprep.subr.mxu0 0.0
    %79 = vmatpush1.xpose.msra.mxu0 0.0
    %80 = vmatprep.subr.mxu0 0.0
    %81 = vmatpush1.xpose.msra.mxu0 0.0
    %82 = vmatprep.subr.mxu0 0.0
    %83 = vmatpush1.xpose.msra.mxu0 0.0
    %84 = vmatprep.subr.mxu0 0.0
    %85 = vmatpush1.xpose.msra.mxu0 0.0
    %86 = vmatprep.subr.mxu0 0.0
    %87 = vmatpush1.xpose.msra.mxu0 0.0
    %88 = vmatprep.subr.mxu0 0.0
    %89 = vmatpush1.xpose.msra.mxu0 0.0
    %90 = vmatprep.subr.mxu0 0.0
    %91 = vmatpush1.xpose.msra.mxu0 0.0
    %92 = vmatprep.subr.mxu0 0.0
    %93 = vmatpush1.xpose.msra.mxu0 0.0
    %94 = vmatprep.mubr.f32.mxu0 %v28
    %95 = vmatmul.mubr.f32.gmra.mrb[0].mxu0 %v27
    %v96 = vpop.f32.mrb[0].mxu0
    %v97 = vadd.f32 0.0, %v96
    %v98 = vpop.f32.mrb[0].mxu0
    %99 = vdwg.mxu0
    %v100 = vadd.f32 %v29, %v97
    %vm101 = vcmask 64512
    %102 = vst.msk [vmem:[#allocation5] sm:$0xff] %vm101, %v100
    // Predicated region
    $region14: #{tpu_custom_call.1} parent=1 // pred_check
      %p103 = pneg %p21
    $region15: #{tpu_custom_call.1} parent=1 // pred_check_branch
      %105 = sbr.rel (%p103) target = $region17
    $region16: #{tpu_custom_call.1} parent=1 // pred_region
      %v106 = vld [vmem:[#allocation5] sm:$0xff]
      %v107 = vmul.f32 %v106, 0.00048828125
      %108 = vst.msk [vmem:[#allocation5] sm:$0xff] %vm101, %v107
    $region17: #{tpu_custom_call.1} parent=1 // pred_fallthru
      _
    // Predicated region
    $region18: #{tpu_custom_call.1} parent=1 // pred_check
      _
    $region19: #{tpu_custom_call.1} parent=1 // pred_check_branch
      %110 = sbr.rel (0) target = $region21
    $region20: #{tpu_custom_call.1} parent=1 // pred_region
      %s112 = ssub.s32 128, 128
      %113 = vsyncadd [#allocation4], %s112
      %s115 = sshll.u32 [#allocation5], 4
      %s116 = int_to_ptr.vmem [resolvable:$true] %s115
      %118 = dma.vmem_to_hbm [thread:$0]  %s116, 128, %s1, [#allocation4]
    $region21: #{tpu_custom_call.1} parent=1 // pred_fallthru
      _
    // Predicated region
    $region22: #{tpu_custom_call.1} parent=1 // pred_check
      _
    $region23: #{tpu_custom_call.1} parent=1 // pred_check_branch
      %120 = sbr.rel (0) target = $region25
    $region24: #{tpu_custom_call.1} parent=1 // pred_region
      %121 = dma.done [#allocation4], 128
    $region25: #{tpu_custom_call.1} parent=1 // pred_fallthru
      _
    %122 = vsyncpa [#allocation3], 1
    %123 = vsyncpa [#allocation4], 1

</llo_original>
